<compile_context>
chip_gen: v5e
topology: v5e:2x2
jax: 0.10.0
libtpu: 0.0.40
codegen_flags: <defaults>
</compile_context>

<pallas_src>
import math

import jax
import jax.numpy as jnp
from jax.experimental import pallas as pl
from jax.experimental.pallas import tpu as pltpu


def bt_kernel(affine_ref, x_ref, w_ref, params_ref, o_ref):
    # Affine scalars from SMEM.
    gain = affine_ref[0, 0]
    abias = affine_ref[0, 1]

    x = x_ref[...]                                   # (TB, W) f32
    x_norm = x * gain + abias                        # Affine pre-norm (f32)

    # Block-diagonal linear for this partition group: bf16 MXU, f32 accumulation.
    w = w_ref[0]                                     # (W, W) bf16 (or f32)
    y = jnp.dot(x_norm.astype(w.dtype), w,
                preferred_element_type=jnp.float32)  # (TB, W) f32

    params = params_ref[...]                         # (3, W) f32
    bias = params[0:1, :]
    gamma = params[1:2, :]
    beta = params[2:3, :]

    y = y + bias
    # Supact: (gamma + sigmoid(beta*y) * (1 - gamma)) * y
    inv = jax.nn.sigmoid(beta * y)                   # EUP
    mult = gamma + inv * (1.0 - gamma)

    # residual uses the pre-Affine input x.
    o_ref[...] = (mult * y + x).astype(o_ref.dtype)


def _choose_group(P, d, F):
    """Partitions per weight tile so each tile is ~one MXU pass wide."""
    if F <= 128:
        return P                      # single group: W == F (still one MXU pass)
    if d % 128 == 0:
        return 1                      # per-partition path, already lane-dense
    if 128 % d == 0 and P % (128 // d) == 0:
        return 128 // d               # pack ceil(128/d) partitions -> W == 128
    # TODO(synk): ragged d that doesn't divide 128 -> fall back to one dense group.
    return P


def better_transformer(x, weights, bias, gamma, beta, gain, affine_bias,
                       *, tile_b=256, matmul_dtype=jnp.bfloat16):
    """x: (B, F) f32; weights: (P, d, d); bias/gamma/beta: (F,); gain/affine_bias: scalars."""
    B, F = x.shape
    P, d, _ = weights.shape
    assert P * d == F

    G = _choose_group(P, d, F)
    NG = P // G
    W = G * d

    # Pack weights into per-group block-diagonal tiles (NG, W, W); densification is
    # bounded to a <=~128-wide tile per group (never the full (F, F) matrix).
    wq = weights.astype(matmul_dtype)
    if G == 1:
        grouped_w = wq                                            # (P, d, d)
    else:
        grouped_w = jnp.zeros((NG, W, W), dtype=matmul_dtype)
        for gi in range(NG):
            for j in range(G):
                p = gi * G + j
                grouped_w = grouped_w.at[gi, j * d:(j + 1) * d,
                                         j * d:(j + 1) * d].set(wq[p])

    # Batch tiling (rows). Large tiles amortize per-step overhead and pipeline DMAs.
    tb = B if B <= tile_b else tile_b
    assert B % tb == 0, "batch must be a multiple of the batch tile"
    nb = B // tb

    affine2 = jnp.stack([jnp.asarray(gain, jnp.float32).reshape(()),
                         jnp.asarray(affine_bias, jnp.float32).reshape(())]
                        ).reshape(1, 2)
    params = jnp.stack([bias, gamma, beta]).astype(jnp.float32)    # (3, F)

    return pl.pallas_call(
        bt_kernel,
        out_shape=jax.ShapeDtypeStruct((B, F), x.dtype),
        grid=(NG, nb),
        in_specs=[
            # Affine scalars (gain, bias) in SMEM.
            pl.BlockSpec((1, 2), lambda g, b: (0, 0), memory_space=pltpu.SMEM),
            # Activation tile: rows b, column group g.
            pl.BlockSpec((tb, W), lambda g, b: (b, g)),
            # Weight tile: depends only on g -> stays VMEM-resident across batch tiles.
            pl.BlockSpec((1, W, W), lambda g, b: (g, 0, 0)),
            # Fused (bias, gamma, beta) columns for this group.
            pl.BlockSpec((3, W), lambda g, b: (0, g)),
        ],
        out_specs=pl.BlockSpec((tb, W), lambda g, b: (b, g)),
        compiler_params=pltpu.CompilerParams(
            dimension_semantics=("parallel", "parallel")),
    )(affine2, x, grouped_w, params)


def reference(x, weights, bias, gamma, beta, gain, affine_bias, matmul_dtype=None):
    """Pure-JAX reference mirroring the PyTorch forward.

    If matmul_dtype is given, the matmul operands are rounded through that dtype
    (to mirror the kernel's bf16 MXU path) but everything else stays f32.
    """
    P, d, _ = weights.shape
    F = P * d
    w = weights
    if matmul_dtype is not None:
        w = w.astype(matmul_dtype).astype(jnp.float32)
    mat = jnp.zeros((F, F), dtype=jnp.float32)
    for p in range(P):
        mat = mat.at[p * d:(p + 1) * d, p * d:(p + 1) * d].set(w[p])
    x_norm = x * gain + affine_bias
    if matmul_dtype is not None:
        x_norm = x_norm.astype(matmul_dtype).astype(jnp.float32)
    y = x_norm @ mat + bias
    inv = jax.nn.sigmoid(beta * y)
    mult = gamma + inv * (1.0 - gamma)
    return mult * y + x


if __name__ == "__main__":
    B = 8                  # batch
    n_partitions = 4
    int_dim = 8
    in_size = n_partitions * int_dim   # 32

    key = jax.random.PRNGKey(0)
    k_x, k_w, k_b, k_g, k_be = jax.random.split(key, 5)

    x = jax.random.normal(k_x, (B, in_size), dtype=jnp.float32)

    # deterministic parameter init mimicking kaiming_uniform_(a=sqrt(5)) + uniform bias
    fan_in = int_dim * int_dim
    gain_kaiming = math.sqrt(2.0 / (1.0 + 5.0))          # a = sqrt(5)
    w_bound = gain_kaiming * math.sqrt(3.0 / fan_in)
    weights = jax.random.uniform(
        k_w, (n_partitions, int_dim, int_dim), minval=-w_bound, maxval=w_bound,
        dtype=jnp.float32)
    b_bound = 1.0 / math.sqrt(fan_in)
    bias = jax.random.uniform(k_b, (in_size,), minval=-b_bound, maxval=b_bound,
                              dtype=jnp.float32)

    # Non-trivial Supact / Affine parameters so the activation path is exercised.
    gamma = jax.random.uniform(k_g, (in_size,), minval=0.5, maxval=1.5,
                               dtype=jnp.float32)
    beta = 0.5 * jax.random.normal(k_be, (in_size,), dtype=jnp.float32)
    gain = jnp.float32(1.25)
    affine_bias = jnp.float32(0.1)

    out = better_transformer(x, weights, bias, gamma, beta, gain, affine_bias)
    out = jax.block_until_ready(out)
    assert out.shape == (B, in_size)

    # Tight check against a reference that mirrors the kernel's bf16 matmul rounding.
    ref_bf16 = reference(x, weights, bias, gamma, beta, gain, affine_bias,
                         matmul_dtype=jnp.bfloat16)
    assert jnp.allclose(out, ref_bf16, atol=1e-3, rtol=1e-3), \
        "mismatch vs bf16-matched reference"

    # Loose sanity check against the pure-f32 PyTorch-equivalent reference.
    ref_f32 = reference(x, weights, bias, gamma, beta, gain, affine_bias)
    assert jnp.allclose(out, ref_f32, atol=5e-2, rtol=5e-2), \
        "mismatch vs f32 reference"

    print("KERNEL_OK")
</pallas_src>

<mosaic_0001>
module attributes {stable_mosaic.version = 11 : i64} {
  func.func @bt_kernel(%arg0: i32, %arg1: i32, %arg2: memref<1x2xf32, #tpu.memory_space<smem>>, %arg3: memref<8x32xf32, #tpu.memory_space<vmem>>, %arg4: memref<1x32x32xbf16, #tpu.memory_space<vmem>>, %arg5: memref<3x32xf32, #tpu.memory_space<vmem>>, %arg6: memref<8x32xf32, #tpu.memory_space<vmem>>) attributes {dimension_semantics = [#tpu.dimension_semantics<parallel>, #tpu.dimension_semantics<parallel>], iteration_bounds = array<i64: 1, 1>, scalar_prefetch = 0 : i64, scratch_operands = 0 : i64, tpu.core_type = #tpu.core_type<tc>, window_params = [{transform_indices = @transform_0, window_bounds = array<i64: 1, 2>}, {transform_indices = @transform_1, window_bounds = array<i64: 8, 32>}, {transform_indices = @transform_2, window_bounds = array<i64: 1, 32, 32>}, {transform_indices = @transform_3, window_bounds = array<i64: 3, 32>}, {transform_indices = @transform_4, window_bounds = array<i64: 8, 32>}]} {
    %c0 = arith.constant 0 : index
    %c0_0 = arith.constant 0 : index
    %0 = memref.load %arg2[%c0, %c0_0] : memref<1x2xf32, #tpu.memory_space<smem>>
    %c0_1 = arith.constant 0 : index
    %c1 = arith.constant 1 : index
    %1 = memref.load %arg2[%c0_1, %c1] : memref<1x2xf32, #tpu.memory_space<smem>>
    %c0_2 = arith.constant 0 : index
    %c0_3 = arith.constant 0 : index
    %2 = vector.load %arg3[%c0_2, %c0_3] : memref<8x32xf32, #tpu.memory_space<vmem>>, vector<8x32xf32>
    %3 = vector.broadcast %0 : f32 to vector<8x32xf32>
    %4 = arith.mulf %2, %3 : vector<8x32xf32>
    %5 = vector.broadcast %1 : f32 to vector<8x32xf32>
    %6 = arith.addf %4, %5 : vector<8x32xf32>
    %c0_4 = arith.constant 0 : index
    %c0_5 = arith.constant 0 : index
    %c0_6 = arith.constant 0 : index
    %7 = vector.load %arg4[%c0_4, %c0_5, %c0_6] : memref<1x32x32xbf16, #tpu.memory_space<vmem>>, vector<1x32x32xbf16>
    %8 = vector.shape_cast %7 : vector<1x32x32xbf16> to vector<32x32xbf16>
    %9 = arith.truncf %6 : vector<8x32xf32> to vector<8x32xbf16>
    %cst = arith.constant dense<0.000000e+00> : vector<8x32xf32>
    %10 = tpu.matmul %9, %8, %cst {dimension_numbers = #tpu.dot_dimension_numbers<[1], [0], [0], [1], [0, 0, 1, 1], [], []>} : vector<8x32xbf16>, vector<32x32xbf16>, vector<8x32xf32> -> vector<8x32xf32>
    %c0_7 = arith.constant 0 : index
    %c0_8 = arith.constant 0 : index
    %11 = vector.load %arg5[%c0_7, %c0_8] : memref<3x32xf32, #tpu.memory_space<vmem>>, vector<3x32xf32>
    %12 = vector.extract_strided_slice %11 {offsets = [0, 0], sizes = [1, 32], strides = [1, 1]} : vector<3x32xf32> to vector<1x32xf32>
    %13 = vector.extract_strided_slice %11 {offsets = [1, 0], sizes = [1, 32], strides = [1, 1]} : vector<3x32xf32> to vector<1x32xf32>
    %14 = vector.extract_strided_slice %11 {offsets = [2, 0], sizes = [1, 32], strides = [1, 1]} : vector<3x32xf32> to vector<1x32xf32>
    %15 = vector.broadcast %12 : vector<1x32xf32> to vector<8x32xf32>
    %16 = arith.addf %10, %15 : vector<8x32xf32>
    %17 = vector.broadcast %14 : vector<1x32xf32> to vector<8x32xf32>
    %18 = arith.mulf %17, %16 : vector<8x32xf32>
    %19 = arith.negf %18 : vector<8x32xf32>
    %20 = math.exp %19 : vector<8x32xf32>
    %cst_9 = arith.constant 1.000000e+00 : f32
    %21 = vector.broadcast %cst_9 : f32 to vector<8x32xf32>
    %22 = arith.addf %21, %20 : vector<8x32xf32>
    %23 = arith.divf %21, %22 : vector<8x32xf32>
    %cst_10 = arith.constant 1.000000e+00 : f32
    %24 = vector.broadcast %cst_10 : f32 to vector<1x32xf32>
    %25 = arith.subf %24, %13 : vector<1x32xf32>
    %26 = vector.broadcast %25 : vector<1x32xf32> to vector<8x32xf32>
    %27 = arith.mulf %23, %26 : vector<8x32xf32>
    %28 = vector.broadcast %13 : vector<1x32xf32> to vector<8x32xf32>
    %29 = arith.addf %28, %27 : vector<8x32xf32>
    %30 = arith.mulf %29, %16 : vector<8x32xf32>
    %31 = arith.addf %30, %2 : vector<8x32xf32>
    %c0_11 = arith.constant 0 : index
    %c0_12 = arith.constant 0 : index
    %32 = vector.load %arg6[%c0_11, %c0_12] : memref<8x32xf32, #tpu.memory_space<vmem>>, vector<8x32xf32>
    tpu.vector_store %arg6[%c0_11, %c0_12], %31 {strides = array<i32>} : memref<8x32xf32, #tpu.memory_space<vmem>>, vector<8x32xf32>,
    return
  }
  func.func @transform_0(%arg0: i32, %arg1: i32) -> (i32, i32) {
    %c0_i32 = arith.constant 0 : i32
    %c0_i32_0 = arith.constant 0 : i32
    %c0_i32_1 = arith.constant 0 : i32
    return %c0_i32, %c0_i32_0 : i32, i32
  }
  func.func @transform_1(%arg0: i32, %arg1: i32) -> (i32, i32) {
    %c0_i32 = arith.constant 0 : i32
    return %arg1, %arg0 : i32, i32
  }
  func.func @transform_2(%arg0: i32, %arg1: i32) -> (i32, i32, i32) {
    %c0_i32 = arith.constant 0 : i32
    %c0_i32_0 = arith.constant 0 : i32
    %c0_i32_1 = arith.constant 0 : i32
    return %arg0, %c0_i32, %c0_i32_0 : i32, i32, i32
  }
  func.func @transform_3(%arg0: i32, %arg1: i32) -> (i32, i32) {
    %c0_i32 = arith.constant 0 : i32
    %c0_i32_0 = arith.constant 0 : i32
    return %c0_i32, %arg0 : i32, i32
  }
  func.func @transform_4(%arg0: i32, %arg1: i32) -> (i32, i32) {
    %c0_i32 = arith.constant 0 : i32
    return %arg1, %arg0 : i32, i32
  }
}

</mosaic_0001>

<llo_original>
// kernel: tpu_custom_call.1
$region0: #{tpu_custom_call.1}
  #allocation0 [shape = 'u32[]', space=smem, size = 0x4, offset = 0x4, fixed_abs, tag = 'smem constant byte address 0x4 - core index']
  #allocation1 [shape = 'u32[72,128]{1,0:T(1,128)}', space=vmem, size = 0x9000, scoped, tag = 'internal scratch']
  %s0 = inlined_call_operand.hbm [shape: f32[1,2], index: 0, kind: input, shape index: {}]
  %s1 = inlined_call_operand.hbm [shape: f32[8,32], index: 1, kind: input, shape index: {}]
  %s2 = inlined_call_operand.hbm [shape: bf16[1,32,32], index: 2, kind: input, shape index: {}]
  %s3 = inlined_call_operand.hbm [shape: f32[3,32], index: 3, kind: input, shape index: {}]
  %s4 = inlined_call_operand.hbm [shape: f32[8,32], index: 4, kind: output, shape index: {}]
  %s5 = sld [smem:[#allocation0]]
  $region42: #{tpu_custom_call.1} parent=0
    _
  %s7 = ssub.s32 1, %s5
  %s8 = scalar_select 0, %s7, %s5
  $region1: #{tpu_custom_call.1} parent=0
    #allocation2 [shape = 'u8[512]{0}', space=smem, size = 0x200, scoped, tag = 'input window, operand 0, single buffered']
    #allocation3 [shape = 's32[1]{0}', space=sflag, size = 0x4, scoped, tag = 'scoped memory for tpu_custom_call.1']
    #allocation4 [shape = 's32[1]{0}', space=sflag, size = 0x4, scoped, tag = 'scoped memory for tpu_custom_call.1']
    #allocation5 [shape = 's32[1]{0}', space=sflag, size = 0x4, scoped, tag = 'scoped memory for tpu_custom_call.1']
    #allocation6 [shape = 'u8[4096]{0}', space=vmem, size = 0x1000, scoped, tag = 'input window, operand 1, single buffered']
    #allocation7 [shape = 'u8[8192]{0}', space=vmem, size = 0x2000, scoped, tag = 'input window, operand 2, single buffered']
    #allocation8 [shape = 's32[1]{0}', space=sflag, size = 0x4, scoped, tag = 'scoped memory for tpu_custom_call.1']
    #allocation9 [shape = 'u8[2048]{0}', space=vmem, size = 0x800, scoped, tag = 'input window, operand 3, single buffered']
    #allocation10 [shape = 'u8[4096]{0}', space=vmem, size = 0x1000, scoped, tag = 'output window, operand 0, single buffered']
    %9 = vsyncpa [#allocation5], 0
    %10 = vsyncpa [#allocation3], 0
    %11 = vsyncpa [#allocation8], 0
    %12 = vsyncpa [#allocation4], 0
    // Predicated region
    $region2: #{tpu_custom_call.1} parent=1 // pred_check
      _
    $region3: #{tpu_custom_call.1} parent=1 // pred_check_branch
      %14 = sbr.rel (0) target = $region5
    $region4: #{tpu_custom_call.1} parent=1 // pred_region
      %16 = vsyncadd [#allocation5], 0
      %s18 = sshll.u32 %s0, 4
      %s19 = int_to_ptr.hbm [resolvable:$true] %s18
      %21 = dma.hbm_to_smem %s19, 16, [#allocation2], [#allocation5]
    $region5: #{tpu_custom_call.1} parent=1 // pred_fallthru
      _
    // Predicated region
    $region6: #{tpu_custom_call.1} parent=1 // pred_check
      _
    $region7: #{tpu_custom_call.1} parent=1 // pred_check_branch
      %23 = sbr.rel (0) target = $region9
    $region8: #{tpu_custom_call.1} parent=1 // pred_region
      %25 = vsyncadd [#allocation3], 0
      %s27 = sshll.u32 %s1, 4
      %s28 = int_to_ptr.hbm [resolvable:$true] %s27
      %s29 = sshll.u32 [#allocation6], 4
      %s30 = int_to_ptr.vmem [resolvable:$true] %s29
      %32 = dma.hbm_to_vmem [thread:$0]  %s28, 128, %s30, [#allocation3]
    $region9: #{tpu_custom_call.1} parent=1 // pred_fallthru
      _
    // Predicated region
    $region10: #{tpu_custom_call.1} parent=1 // pred_check
      _
    $region11: #{tpu_custom_call.1} parent=1 // pred_check_branch
      %34 = sbr.rel (0) target = $region13
    $region12: #{tpu_custom_call.1} parent=1 // pred_region
      %36 = vsyncadd [#allocation8], 0
      %s37 = sshll.u32 %s2, 4
      %s38 = int_to_ptr.hbm [resolvable:$true] %s37
      %s39 = sshll.u32 [#allocation7], 4
      %s40 = int_to_ptr.vmem [resolvable:$true] %s39
      %45 = dma.hbm_to_vmem [thread:$0]  %s38, 256, %s40, [#allocation8], 64, 64, 4
    $region13: #{tpu_custom_call.1} parent=1 // pred_fallthru
      _
    // Predicated region
    $region14: #{tpu_custom_call.1} parent=1 // pred_check
      _
    $region15: #{tpu_custom_call.1} parent=1 // pred_check_branch
      %47 = sbr.rel (0) target = $region17
    $region16: #{tpu_custom_call.1} parent=1 // pred_region
      %49 = vsyncadd [#allocation8], 0
      %s51 = sshll.u32 %s3, 4
      %s52 = int_to_ptr.hbm [resolvable:$true] %s51
      %s53 = sshll.u32 [#allocation9], 4
      %s54 = int_to_ptr.vmem [resolvable:$true] %s53
      %56 = dma.hbm_to_vmem [thread:$0]  %s52, 64, %s54, [#allocation8]
    $region17: #{tpu_custom_call.1} parent=1 // pred_fallthru
      _
    // Predicated region
    $region18: #{tpu_custom_call.1} parent=1 // pred_check
      _
    $region19: #{tpu_custom_call.1} parent=1 // pred_check_branch
      %58 = sbr.rel (0) target = $region21
    $region20: #{tpu_custom_call.1} parent=1 // pred_region
      %60 = dma.done [#allocation5], 16
    $region21: #{tpu_custom_call.1} parent=1 // pred_fallthru
      _
    // Predicated region
    $region22: #{tpu_custom_call.1} parent=1 // pred_check
      _
    $region23: #{tpu_custom_call.1} parent=1 // pred_check_branch
      %62 = sbr.rel (0) target = $region25
    $region24: #{tpu_custom_call.1} parent=1 // pred_region
      %64 = dma.done [#allocation3], 128
    $region25: #{tpu_custom_call.1} parent=1 // pred_fallthru
      _
    // Predicated region
    $region26: #{tpu_custom_call.1} parent=1 // pred_check
      _
    $region27: #{tpu_custom_call.1} parent=1 // pred_check_branch
      %66 = sbr.rel (0) target = $region29
    $region28: #{tpu_custom_call.1} parent=1 // pred_region
      %68 = dma.done [#allocation8], 256
    $region29: #{tpu_custom_call.1} parent=1 // pred_fallthru
      _
    // Predicated region
    $region30: #{tpu_custom_call.1} parent=1 // pred_check
      _
    $region31: #{tpu_custom_call.1} parent=1 // pred_check_branch
      %70 = sbr.rel (0) target = $region33
    $region32: #{tpu_custom_call.1} parent=1 // pred_region
      %72 = dma.done [#allocation8], 64
    $region33: #{tpu_custom_call.1} parent=1 // pred_fallthru
      _
    %73 = sfence
    %s75 = sld [smem:[#allocation2]]
    %s76 = sld [smem:[#allocation2 + $0x1]]
    %v77 = vld [vmem:[#allocation6] sm:$0xff]
    %v78 = vstv %s75
    %v79 = vmul.f32 %v77, %v78
    %v80 = vstv %s76
    %v81 = vadd.f32 %v79, %v80
    %v82 = vld [vmem:[#allocation7] sm:$0xf]
    %v83 = vld [vmem:[#allocation7 + $0x4] sm:$0xf]
    %v84 = vld [vmem:[#allocation7 + $0x8] sm:$0xf]
    %v85 = vld [vmem:[#allocation7 + $0xc] sm:$0xf]
    %v86 = vpack.c.bf16 %v81, %v81
    %v87 = vld [vmem:[#allocation9] sm:$0x7]
    %v88 = vperm.slane %v87, 0
    %v93 = vunpack.c.l.b16 %v82
    %v94 = vunpack.c.l.b16 %v83
    %v95 = vunpack.c.l.b16 %v84
    %v96 = vunpack.c.l.b16 %v85
    %v97 = vpack.c.b16 %v94, %v93
    %v98 = vpack.c.b16 %v96, %v95
    %vm101 = vcmask 261120
    %v103 = vsel %vm101, %v86, 0
    %105 = vmatpush.bf16.msra.mxu0 0
    %106 = vmatpush.bf16.msra.mxu0 0
    %107 = vmatpush.bf16.msra.mxu0 0
    %108 = vmatpush.bf16.msra.mxu0 0
    %109 = vmatpush.bf16.msra.mxu0 0
    %110 = vmatpush.bf16.msra.mxu0 0
    %111 = vmatpush.bf16.msra.mxu0 %v98
    %112 = vmatpush.bf16.msra.mxu0 %v97
    %113 = vmatmul.bf16.gmra.mxu0 %v103
    %v114 = vpop.f32.mrf.mxu0
    %v115 = vadd.f32 %v88, %v114
    %v116 = vpop.f32.mrf.mxu0
    %117 = vdwg.mxu0
    %v118 = vperm.slane %v87, 2
    %v119 = vmul.f32 %v118, %v115
    %v120 = vxor.u32 %v119, 2147483648
    %v121 = vmul.f32 %v120, 1.442695
    %v122 = vpow.pop %v121
    %v123 = vadd.f32 %v122, 1.0
    %v124 = vrcp.pop %v123
    %v125 = vmul.f32 %v123, %v124
    %v126 = vsub.f32 1.0, %v125
    %v127 = vmul.f32 %v124, %v126
    %v128 = vadd.f32 %v124, %v127
    %vm129 = vweird.f32 %v123
    %vm130 = vweird.f32 %v124
    %vm131 = vmor %vm129, %vm130
    %v132 = vsel %vm131, %v124, %v128
    %v133 = vand.u32 2147483647, %v123
    %vm134 = vcmp.eq.f32.partialorder %v133, 8.507059e+37
    %v135 = vand.u32 %v123, 2147483648
    %v136 = vor.u32 1.1754944e-38, %v135
    %v137 = vsel %vm134, %v136, %v132
    %v138 = vmul.f32 1.0, %v137
    %v139 = vsub.f32 1.0, %v87
    %v140 = vperm.slane %v139, 1
    %v141 = vmul.f32 %v138, %v140
    %v142 = vperm.slane %v87, 1
    %v143 = vadd.f32 %v142, %v141
    %v144 = vmul.f32 %v143, %v115
    %v145 = vadd.f32 %v144, %v77
    %146 = vst.msk [vmem:[#allocation10] sm:$0xff] %vm101, %v145
    // Predicated region
    $region34: #{tpu_custom_call.1} parent=1 // pred_check
      _
    $region35: #{tpu_custom_call.1} parent=1 // pred_check_branch
      %148 = sbr.rel (0) target = $region37
    $region36: #{tpu_custom_call.1} parent=1 // pred_region
      %150 = vsyncadd [#allocation4], 0
      %s152 = sshll.u32 [#allocation10], 4
      %s153 = int_to_ptr.vmem [resolvable:$true] %s152
      %s154 = sshll.u32 %s4, 4
      %s155 = int_to_ptr.hbm [resolvable:$true] %s154
      %157 = dma.vmem_to_hbm [thread:$0]  %s153, 128, %s155, [#allocation4]
    $region37: #{tpu_custom_call.1} parent=1 // pred_fallthru
      _
    // Predicated region
    $region38: #{tpu_custom_call.1} parent=1 // pred_check
      _
    $region39: #{tpu_custom_call.1} parent=1 // pred_check_branch
      %159 = sbr.rel (0) target = $region41
    $region40: #{tpu_custom_call.1} parent=1 // pred_region
      %161 = dma.done [#allocation4], 128
    $region41: #{tpu_custom_call.1} parent=1 // pred_fallthru
      _
    %162 = vsyncpa [#allocation3], 1
    %163 = vsyncpa [#allocation8], 1
    %164 = vsyncpa [#allocation4], 1
    %165 = vsyncpa [#allocation5], 1

</llo_original>
